<compile_context>
chip_gen: v7x
topology: tpu7x:2x2x1
jax: 0.10.0
libtpu: 0.0.40
codegen_flags: <defaults>
</compile_context>

<pallas_src>
import functools
import math

import numpy as np
import jax
import jax.numpy as jnp
from jax.experimental import pallas as pl
from jax.experimental.pallas import tpu as pltpu

DEGREE = 1  # matches `degree = 1` in the reference file


def _round_up(x, k):
    return ((x + k - 1) // k) * k


def _resnet_relu_kernel(x_ref, w1_ref, w2_ref, w3_ref, w4_ref, w5_ref, w6_ref,
                        b_ref, wout_ref, out_ref, s_ref, *, dim):
    """One batch tile.  Layout: features on sublanes, batch on the 128-lane axis.

      x_ref    : (dim, TN) compute dtype  -- streamed per grid step (native width!)
      w*_ref   : (m, m)    compute dtype  -- grid-invariant (fc1 is column-padded)
      b_ref    : (m, 6)    f32            -- packed biases, column j = fc{j+1}
      wout_ref : (1, m)    compute dtype  -- out-projection row
      out_ref  : (1, TN)   f32            -- lane-dense output row
      s_ref    : (m, TN)   f32 scratch    -- zero-padded skip tensor
    """
    m = s_ref.shape[0]

    x32 = x_ref[...].astype(jnp.float32)                      # (dim, TN)

    # s = [x ; 0]  ( == (x @ Ix)^T from the PyTorch module ).  Built through VMEM
    # scratch: zero-fill + masked sub-slice store, both rock-solid lowerings.
    if dim < m:
        s_ref[...] = jnp.zeros_like(s_ref)
        s_ref[0:dim, :] = x32
        s = s_ref[...]
    else:
        s = x32

    def lin(v, w_ref, col):
        # (m, m) @ (m, TN) on the MXU with f32 accumulation, plus per-row bias.
        # Only the matmul operands are cast to the weights' dtype (bf16 opt-in).
        return (jnp.dot(w_ref[...], v.astype(w_ref.dtype),
                        preferred_element_type=jnp.float32)
                + b_ref[:, col:col + 1])

    def act(v):
        if DEGREE != 1:          # trace-time constant; folds away for DEGREE == 1
            v = v ** DEGREE
        return jnp.maximum(v, 0.0)

    y = act(lin(s, w1_ref, 0))   # fc1 (padded weight columns hit the zero rows of s)
    y = act(lin(y, w2_ref, 1))   # fc2
    y = y + s
    s = y
    y = act(lin(y, w3_ref, 2))   # fc3
    y = act(lin(y, w4_ref, 3))   # fc4
    y = y + s
    s = y
    y = act(lin(y, w5_ref, 4))   # fc5
    y = act(lin(y, w6_ref, 5))   # fc6
    y = y + s

    # outlayer (m -> 1, no bias): (1, m) @ (m, TN) -> (1, TN); lane-dense unmasked store.
    out_ref[...] = jnp.dot(wout_ref[...], y.astype(wout_ref.dtype),
                           preferred_element_type=jnp.float32)


def init_params(key, dim, m):
    """Deterministic PyTorch-Linear-style init.  Weights stored as (in, out)."""
    params = {}
    keys = jax.random.split(key, 13)

    def linear(kw, kb, fan_in, fan_out, bias=True):
        bound = 1.0 / math.sqrt(fan_in)
        w = jax.random.uniform(kw, (fan_in, fan_out), jnp.float32, -bound, bound)
        b = (jax.random.uniform(kb, (1, fan_out), jnp.float32, -bound, bound)
             if bias else None)
        return w, b

    params["w1"], params["b1"] = linear(keys[0], keys[1], dim, m)
    params["w2"], params["b2"] = linear(keys[2], keys[3], m, m)
    params["w3"], params["b3"] = linear(keys[4], keys[5], m, m)
    params["w4"], params["b4"] = linear(keys[6], keys[7], m, m)
    params["w5"], params["b5"] = linear(keys[8], keys[9], m, m)
    params["w6"], params["b6"] = linear(keys[10], keys[11], m, m)
    params["wout"], _ = linear(keys[12], keys[12], m, 1, bias=False)
    # Ix: (dim, m) identity embedding (only used by the pure-JAX reference).
    ix = jnp.zeros((dim, m), jnp.float32).at[jnp.arange(dim), jnp.arange(dim)].set(1.0)
    params["ix"] = ix
    return params


def resnet_relu_forward(x, params, boundary_control_type="none",
                        tile_n=2048, compute_dtype=jnp.float32,
                        x_buffers=2, weight_buffers=None,
                        vmem_limit_bytes=None):
    """Pallas forward pass.

    tile_n          : batch tile (lane axis), rounded to a multiple of 128.
    compute_dtype   : dtype of MXU operands (f32 or bf16); accumulation is f32.
    x_buffers       : pipeline depth for the streamed x tile (2 = Pallas default).
    weight_buffers  : pipeline depth for grid-invariant weights (None = default;
                      pass 1 on v7x at large m to halve weight VMEM).
    """
    N, dim = x.shape
    m = params["w1"].shape[1]
    assert dim <= m, "module requires dim <= m (Ix identity embedding)"

    cd = jnp.dtype(compute_dtype)

    # Batch tile on the lane axis: multiple of 128; prefer >= 2 grid steps (so
    # dimension_semantics=("parallel",) can use both v7x TensorCores) but never go
    # below 128 lanes per step.
    tile_n = max(128, _round_up(int(tile_n), 128))
    tile_n = min(tile_n, max(128, _round_up((N + 1) // 2, 128)))
    padded_n = _round_up(N, tile_n)
    num_tiles = padded_n // tile_n

    # x streamed at its native feature width (dim rows), batch on lanes, in the
    # compute dtype.  The transpose/pad touches only N*dim elements (tiny) and is
    # what removes the m/dim HBM inflation of the previous version.
    x_t = jnp.pad(x.astype(cd).T, ((0, 0), (0, padded_n - N)))

    # Weights in (out, in) orientation so each layer is w @ act.  fc1's weight gets
    # zero columns appended so it consumes the zero-padded skip tensor directly
    # (identical numerics; the padded weight is grid-invariant so the cost is nil).
    w1p = jnp.pad(params["w1"].T, ((0, 0), (0, m - dim))).astype(cd)
    w2, w3, w4, w5, w6 = (params[k].T.astype(cd) for k in ("w2", "w3", "w4", "w5", "w6"))
    wout_row = params["wout"].T.astype(cd)                                    # (1, m)
    bias_pack = jnp.concatenate(
        [params[f"b{i}"].T for i in range(1, 7)], axis=1).astype(jnp.float32)  # (m, 6)

    # Explicit VMEM budget: double-buffered weights + x buffers + out buffers +
    # skip scratch + a few live f32 intermediates + headroom, clamped to the device.
    if vmem_limit_bytes is None:
        cds = cd.itemsize
        w_bytes = (6 * m * m + m) * cds + m * 6 * 4
        x_bytes = max(dim, 8) * tile_n * cds          # sublane-padded x tile
        o_bytes = 8 * tile_n * 4                      # sublane-padded out tile
        s_bytes = m * tile_n * 4                      # skip-tensor scratch
        live = 6 * m * tile_n * 4                     # live f32 intermediates
        need = (2 * w_bytes + max(2, int(x_buffers)) * x_bytes + 2 * o_bytes
                + s_bytes + live + (4 << 20))
        try:
            phys = int(pltpu.get_tpu_info().vmem_capacity_bytes)
        except Exception:
            phys = 64 << 20                           # v7x physical minimum
        vmem_limit_bytes = int(min(max(need, 32 << 20), (phys * 3) // 4))

    inv = lambda i: (0, 0)

    def _spec(shape, index_map, nbuf=None):
        if nbuf is None or int(nbuf) == 2:
            return pl.BlockSpec(shape, index_map)     # Pallas default double-buffering
        return pl.BlockSpec(shape, index_map, pipeline_mode=pl.Buffered(int(nbuf)))

    kernel = functools.partial(_resnet_relu_kernel, dim=dim)

    out = pl.pallas_call(
        kernel,
        out_shape=jax.ShapeDtypeStruct((1, padded_n), jnp.float32),
        grid_spec=pltpu.PrefetchScalarGridSpec(
            num_scalar_prefetch=0,
            grid=(num_tiles,),
            in_specs=[
                _spec((dim, tile_n), lambda i: (0, i), x_buffers),   # streamed x tile
                _spec((m, m), inv, weight_buffers),                  # fc1 (col-padded)
                _spec((m, m), inv, weight_buffers),                  # fc2
                _spec((m, m), inv, weight_buffers),                  # fc3
                _spec((m, m), inv, weight_buffers),                  # fc4
                _spec((m, m), inv, weight_buffers),                  # fc5
                _spec((m, m), inv, weight_buffers),                  # fc6
                _spec((m, 6), inv, weight_buffers),                  # packed biases
                _spec((1, m), inv, weight_buffers),                  # out-projection row
            ],
            out_specs=pl.BlockSpec((1, tile_n), lambda i: (0, i)),
            scratch_shapes=[pltpu.VMEM((m, tile_n), jnp.float32)],   # skip tensor s
        ),
        compiler_params=pltpu.CompilerParams(
            dimension_semantics=("parallel",),
            vmem_limit_bytes=vmem_limit_bytes),
    )(x_t, w1p, w2, w3, w4, w5, w6, bias_pack, wout_row)

    y = out[0, :N]                                   # lane-dense slab -> (N,)

    if boundary_control_type == "none":
        return y
    elif boundary_control_type == "net_u":
        # elementwise boundary control on x (cheap JAX glue outside the kernel)
        sum_w_2 = jnp.sum(x[:, 2:], axis=1) ** 2
        base = (jnp.exp(2 * x[:, 0]) - 4 * x[:, 1] * (1 + jnp.exp(-sum_w_2)) > 0
                ).astype(jnp.float32)                # g(...)
        sxy = jnp.sin(np.pi / 2 * x[:, 0]) * jnp.sin(np.pi / 2 * x[:, 1])
        return sxy * y + base * (1 - sxy)
    elif boundary_control_type == "net_v":
        return jnp.cos(np.pi / 2 * x[:, 0]) * jnp.cos(np.pi / 2 * x[:, 1]) * y
    else:
        # TODO(synk): boundary_control_type='cube' (the __init__ default) falls through
        # every branch in the PyTorch forward and returns None; mirrored here.
        return None


def resnet_relu_reference(x, params, boundary_control_type="none"):
    """Pure-JAX reference mirroring the PyTorch forward (for correctness check)."""
    s = x @ params["ix"]
    y = jnp.maximum((x @ params["w1"] + params["b1"]) ** DEGREE, 0.0)
    y = jnp.maximum((y @ params["w2"] + params["b2"]) ** DEGREE, 0.0)
    y = y + s
    s = y
    y = jnp.maximum((y @ params["w3"] + params["b3"]) ** DEGREE, 0.0)
    y = jnp.maximum((y @ params["w4"] + params["b4"]) ** DEGREE, 0.0)
    y = y + s
    s = y
    y = jnp.maximum((y @ params["w5"] + params["b5"]) ** DEGREE, 0.0)
    y = jnp.maximum((y @ params["w6"] + params["b6"]) ** DEGREE, 0.0)
    y = y + s
    y = y @ params["wout"]
    return y[:, 0]


if __name__ == "__main__":
    # Small shapes consistent with the module: dim=2 inputs, hidden width m=32.
    N, dim, m = 16, 2, 32
    key = jax.random.PRNGKey(0)
    kx, kp = jax.random.split(key)
    x = jax.random.uniform(kx, (N, dim), jnp.float32, -1.0, 1.0)
    params = init_params(kp, dim, m)

    ref = resnet_relu_reference(x, params, boundary_control_type="none")

    # f32 path (tight tolerance)
    out = resnet_relu_forward(x, params, boundary_control_type="none")
    out = jax.block_until_ready(out)
    np.testing.assert_allclose(np.asarray(out), np.asarray(ref), rtol=1e-5, atol=1e-5)

    # bf16-MXU path (opt-in; x streamed in bf16, f32 accumulation) — loose tolerance
    out_bf16 = resnet_relu_forward(x, params, boundary_control_type="none",
                                   compute_dtype=jnp.bfloat16)
    out_bf16 = jax.block_until_ready(out_bf16)
    np.testing.assert_allclose(np.asarray(out_bf16), np.asarray(ref),
                               rtol=1e-1, atol=1e-1)

    # Multi-tile grid path (num_tiles >= 2) at a slightly larger batch / width.
    N2, m2 = 1000, 64
    kx2, kp2 = jax.random.split(jax.random.PRNGKey(1))
    x2 = jax.random.uniform(kx2, (N2, dim), jnp.float32, -1.0, 1.0)
    params2 = init_params(kp2, dim, m2)
    ref2 = resnet_relu_reference(x2, params2, boundary_control_type="none")
    out2 = resnet_relu_forward(x2, params2, boundary_control_type="none")
    out2 = jax.block_until_ready(out2)
    np.testing.assert_allclose(np.asarray(out2), np.asarray(ref2),
                               rtol=1e-4, atol=1e-4)

    print("KERNEL_OK")
</pallas_src>

<mosaic_0001>
module attributes {stable_mosaic.version = 11 : i64} {
  func.func @_resnet_relu_kernel(%arg0: i32, %arg1: memref<2x128xf32, #tpu.memory_space<vmem>>, %arg2: memref<32x32xf32, #tpu.memory_space<vmem>>, %arg3: memref<32x32xf32, #tpu.memory_space<vmem>>, %arg4: memref<32x32xf32, #tpu.memory_space<vmem>>, %arg5: memref<32x32xf32, #tpu.memory_space<vmem>>, %arg6: memref<32x32xf32, #tpu.memory_space<vmem>>, %arg7: memref<32x32xf32, #tpu.memory_space<vmem>>, %arg8: memref<32x6xf32, #tpu.memory_space<vmem>>, %arg9: memref<1x32xf32, #tpu.memory_space<vmem>>, %arg10: memref<1x128xf32, #tpu.memory_space<vmem>>, %arg11: memref<32x128xf32, #tpu.memory_space<vmem>>) attributes {dimension_semantics = [#tpu.dimension_semantics<parallel>], iteration_bounds = array<i64: 1>, scalar_prefetch = 0 : i64, scratch_operands = 1 : i64, tpu.core_type = #tpu.core_type<tc>, window_params = [{transform_indices = @transform_0, window_bounds = array<i64: 2, 128>}, {pipeline_mode = #tpu.pipeline_mode<synchronous>, transform_indices = @transform_1, window_bounds = array<i64: 32, 32>}, {pipeline_mode = #tpu.pipeline_mode<synchronous>, transform_indices = @transform_2, window_bounds = array<i64: 32, 32>}, {pipeline_mode = #tpu.pipeline_mode<synchronous>, transform_indices = @transform_3, window_bounds = array<i64: 32, 32>}, {pipeline_mode = #tpu.pipeline_mode<synchronous>, transform_indices = @transform_4, window_bounds = array<i64: 32, 32>}, {pipeline_mode = #tpu.pipeline_mode<synchronous>, transform_indices = @transform_5, window_bounds = array<i64: 32, 32>}, {pipeline_mode = #tpu.pipeline_mode<synchronous>, transform_indices = @transform_6, window_bounds = array<i64: 32, 32>}, {pipeline_mode = #tpu.pipeline_mode<synchronous>, transform_indices = @transform_7, window_bounds = array<i64: 32, 6>}, {pipeline_mode = #tpu.pipeline_mode<synchronous>, transform_indices = @transform_8, window_bounds = array<i64: 1, 32>}, {transform_indices = @transform_9, window_bounds = array<i64: 1, 128>}]} {
    %c0 = arith.constant 0 : index
    %c0_0 = arith.constant 0 : index
    %0 = vector.load %arg1[%c0, %c0_0] : memref<2x128xf32, #tpu.memory_space<vmem>>, vector<2x128xf32>
    %cst = arith.constant 0.000000e+00 : f32
    %1 = vector.broadcast %cst : f32 to vector<32x128xf32>
    %c0_1 = arith.constant 0 : index
    %c0_2 = arith.constant 0 : index
    %2 = vector.load %arg11[%c0_1, %c0_2] : memref<32x128xf32, #tpu.memory_space<vmem>>, vector<32x128xf32>
    tpu.vector_store %arg11[%c0_1, %c0_2], %1 {strides = array<i32>} : memref<32x128xf32, #tpu.memory_space<vmem>>, vector<32x128xf32>,
    %c0_3 = arith.constant 0 : index
    %c0_4 = arith.constant 0 : index
    %3 = vector.load %arg11[%c0_3, %c0_4] : memref<32x128xf32, #tpu.memory_space<vmem>>, vector<2x128xf32>
    tpu.vector_store %arg11[%c0_3, %c0_4], %0 {strides = array<i32>} : memref<32x128xf32, #tpu.memory_space<vmem>>, vector<2x128xf32>,
    %c0_5 = arith.constant 0 : index
    %c0_6 = arith.constant 0 : index
    %4 = vector.load %arg11[%c0_5, %c0_6] : memref<32x128xf32, #tpu.memory_space<vmem>>, vector<32x128xf32>
    %c0_7 = arith.constant 0 : index
    %c0_8 = arith.constant 0 : index
    %5 = vector.load %arg2[%c0_7, %c0_8] : memref<32x32xf32, #tpu.memory_space<vmem>>, vector<32x32xf32>
    %cst_9 = arith.constant dense<0.000000e+00> : vector<32x128xf32>
    %6 = tpu.matmul %5, %4, %cst_9 {dimension_numbers = #tpu.dot_dimension_numbers<[1], [0], [0], [1], [0, 0, 1, 1], [], []>} : vector<32x32xf32>, vector<32x128xf32>, vector<32x128xf32> -> vector<32x128xf32>
    %c0_10 = arith.constant 0 : index
    %c0_11 = arith.constant 0 : index
    %7 = vector.load %arg8[%c0_10, %c0_11] : memref<32x6xf32, #tpu.memory_space<vmem>>, vector<32x1xf32>
    %8 = vector.broadcast %7 : vector<32x1xf32> to vector<32x128xf32>
    %9 = arith.addf %6, %8 : vector<32x128xf32>
    %cst_12 = arith.constant 0.000000e+00 : f32
    %10 = vector.broadcast %cst_12 : f32 to vector<32x128xf32>
    %11 = arith.maximumf %9, %10 : vector<32x128xf32>
    %c0_13 = arith.constant 0 : index
    %c0_14 = arith.constant 0 : index
    %12 = vector.load %arg3[%c0_13, %c0_14] : memref<32x32xf32, #tpu.memory_space<vmem>>, vector<32x32xf32>
    %cst_15 = arith.constant dense<0.000000e+00> : vector<32x128xf32>
    %13 = tpu.matmul %12, %11, %cst_15 {dimension_numbers = #tpu.dot_dimension_numbers<[1], [0], [0], [1], [0, 0, 1, 1], [], []>} : vector<32x32xf32>, vector<32x128xf32>, vector<32x128xf32> -> vector<32x128xf32>
    %c0_16 = arith.constant 0 : index
    %c1 = arith.constant 1 : index
    %14 = vector.load %arg8[%c0_16, %c1] : memref<32x6xf32, #tpu.memory_space<vmem>>, vector<32x1xf32>
    %15 = vector.broadcast %14 : vector<32x1xf32> to vector<32x128xf32>
    %16 = arith.addf %13, %15 : vector<32x128xf32>
    %cst_17 = arith.constant 0.000000e+00 : f32
    %17 = vector.broadcast %cst_17 : f32 to vector<32x128xf32>
    %18 = arith.maximumf %16, %17 : vector<32x128xf32>
    %19 = arith.addf %18, %4 : vector<32x128xf32>
    %c0_18 = arith.constant 0 : index
    %c0_19 = arith.constant 0 : index
    %20 = vector.load %arg4[%c0_18, %c0_19] : memref<32x32xf32, #tpu.memory_space<vmem>>, vector<32x32xf32>
    %cst_20 = arith.constant dense<0.000000e+00> : vector<32x128xf32>
    %21 = tpu.matmul %20, %19, %cst_20 {dimension_numbers = #tpu.dot_dimension_numbers<[1], [0], [0], [1], [0, 0, 1, 1], [], []>} : vector<32x32xf32>, vector<32x128xf32>, vector<32x128xf32> -> vector<32x128xf32>
    %c0_21 = arith.constant 0 : index
    %c2 = arith.constant 2 : index
    %22 = vector.load %arg8[%c0_21, %c2] : memref<32x6xf32, #tpu.memory_space<vmem>>, vector<32x1xf32>
    %23 = vector.broadcast %22 : vector<32x1xf32> to vector<32x128xf32>
    %24 = arith.addf %21, %23 : vector<32x128xf32>
    %cst_22 = arith.constant 0.000000e+00 : f32
    %25 = vector.broadcast %cst_22 : f32 to vector<32x128xf32>
    %26 = arith.maximumf %24, %25 : vector<32x128xf32>
    %c0_23 = arith.constant 0 : index
    %c0_24 = arith.constant 0 : index
    %27 = vector.load %arg5[%c0_23, %c0_24] : memref<32x32xf32, #tpu.memory_space<vmem>>, vector<32x32xf32>
    %cst_25 = arith.constant dense<0.000000e+00> : vector<32x128xf32>
    %28 = tpu.matmul %27, %26, %cst_25 {dimension_numbers = #tpu.dot_dimension_numbers<[1], [0], [0], [1], [0, 0, 1, 1], [], []>} : vector<32x32xf32>, vector<32x128xf32>, vector<32x128xf32> -> vector<32x128xf32>
    %c0_26 = arith.constant 0 : index
    %c3 = arith.constant 3 : index
    %29 = vector.load %arg8[%c0_26, %c3] : memref<32x6xf32, #tpu.memory_space<vmem>>, vector<32x1xf32>
    %30 = vector.broadcast %29 : vector<32x1xf32> to vector<32x128xf32>
    %31 = arith.addf %28, %30 : vector<32x128xf32>
    %cst_27 = arith.constant 0.000000e+00 : f32
    %32 = vector.broadcast %cst_27 : f32 to vector<32x128xf32>
    %33 = arith.maximumf %31, %32 : vector<32x128xf32>
    %34 = arith.addf %33, %19 : vector<32x128xf32>
    %c0_28 = arith.constant 0 : index
    %c0_29 = arith.constant 0 : index
    %35 = vector.load %arg6[%c0_28, %c0_29] : memref<32x32xf32, #tpu.memory_space<vmem>>, vector<32x32xf32>
    %cst_30 = arith.constant dense<0.000000e+00> : vector<32x128xf32>
    %36 = tpu.matmul %35, %34, %cst_30 {dimension_numbers = #tpu.dot_dimension_numbers<[1], [0], [0], [1], [0, 0, 1, 1], [], []>} : vector<32x32xf32>, vector<32x128xf32>, vector<32x128xf32> -> vector<32x128xf32>
    %c0_31 = arith.constant 0 : index
    %c4 = arith.constant 4 : index
    %37 = vector.load %arg8[%c0_31, %c4] : memref<32x6xf32, #tpu.memory_space<vmem>>, vector<32x1xf32>
    %38 = vector.broadcast %37 : vector<32x1xf32> to vector<32x128xf32>
    %39 = arith.addf %36, %38 : vector<32x128xf32>
    %cst_32 = arith.constant 0.000000e+00 : f32
    %40 = vector.broadcast %cst_32 : f32 to vector<32x128xf32>
    %41 = arith.maximumf %39, %40 : vector<32x128xf32>
    %c0_33 = arith.constant 0 : index
    %c0_34 = arith.constant 0 : index
    %42 = vector.load %arg7[%c0_33, %c0_34] : memref<32x32xf32, #tpu.memory_space<vmem>>, vector<32x32xf32>
    %cst_35 = arith.constant dense<0.000000e+00> : vector<32x128xf32>
    %43 = tpu.matmul %42, %41, %cst_35 {dimension_numbers = #tpu.dot_dimension_numbers<[1], [0], [0], [1], [0, 0, 1, 1], [], []>} : vector<32x32xf32>, vector<32x128xf32>, vector<32x128xf32> -> vector<32x128xf32>
    %c0_36 = arith.constant 0 : index
    %c5 = arith.constant 5 : index
    %44 = vector.load %arg8[%c0_36, %c5] : memref<32x6xf32, #tpu.memory_space<vmem>>, vector<32x1xf32>
    %45 = vector.broadcast %44 : vector<32x1xf32> to vector<32x128xf32>
    %46 = arith.addf %43, %45 : vector<32x128xf32>
    %cst_37 = arith.constant 0.000000e+00 : f32
    %47 = vector.broadcast %cst_37 : f32 to vector<32x128xf32>
    %48 = arith.maximumf %46, %47 : vector<32x128xf32>
    %49 = arith.addf %48, %34 : vector<32x128xf32>
    %c0_38 = arith.constant 0 : index
    %c0_39 = arith.constant 0 : index
    %50 = vector.load %arg9[%c0_38, %c0_39] : memref<1x32xf32, #tpu.memory_space<vmem>>, vector<1x32xf32>
    %cst_40 = arith.constant dense<0.000000e+00> : vector<1x128xf32>
    %51 = tpu.matmul %50, %49, %cst_40 {dimension_numbers = #tpu.dot_dimension_numbers<[1], [0], [0], [1], [0, 0, 1, 1], [], []>} : vector<1x32xf32>, vector<32x128xf32>, vector<1x128xf32> -> vector<1x128xf32>
    %c0_41 = arith.constant 0 : index
    %c0_42 = arith.constant 0 : index
    %52 = vector.load %arg10[%c0_41, %c0_42] : memref<1x128xf32, #tpu.memory_space<vmem>>, vector<1x128xf32>
    tpu.vector_store %arg10[%c0_41, %c0_42], %51 {strides = array<i32>} : memref<1x128xf32, #tpu.memory_space<vmem>>, vector<1x128xf32>,
    return
  }
  func.func @transform_0(%arg0: i32) -> (i32, i32) {
    %c0_i32 = arith.constant 0 : i32
    %c0_i32_0 = arith.constant 0 : i32
    return %c0_i32, %arg0 : i32, i32
  }
  func.func @transform_1(%arg0: i32) -> (i32, i32) {
    %c0_i32 = arith.constant 0 : i32
    %c0_i32_0 = arith.constant 0 : i32
    %c0_i32_1 = arith.constant 0 : i32
    return %c0_i32, %c0_i32_0 : i32, i32
  }
  func.func @transform_2(%arg0: i32) -> (i32, i32) {
    %c0_i32 = arith.constant 0 : i32
    %c0_i32_0 = arith.constant 0 : i32
    %c0_i32_1 = arith.constant 0 : i32
    return %c0_i32, %c0_i32_0 : i32, i32
  }
  func.func @transform_3(%arg0: i32) -> (i32, i32) {
    %c0_i32 = arith.constant 0 : i32
    %c0_i32_0 = arith.constant 0 : i32
    %c0_i32_1 = arith.constant 0 : i32
    return %c0_i32, %c0_i32_0 : i32, i32
  }
  func.func @transform_4(%arg0: i32) -> (i32, i32) {
    %c0_i32 = arith.constant 0 : i32
    %c0_i32_0 = arith.constant 0 : i32
    %c0_i32_1 = arith.constant 0 : i32
    return %c0_i32, %c0_i32_0 : i32, i32
  }
  func.func @transform_5(%arg0: i32) -> (i32, i32) {
    %c0_i32 = arith.constant 0 : i32
    %c0_i32_0 = arith.constant 0 : i32
    %c0_i32_1 = arith.constant 0 : i32
    return %c0_i32, %c0_i32_0 : i32, i32
  }
  func.func @transform_6(%arg0: i32) -> (i32, i32) {
    %c0_i32 = arith.constant 0 : i32
    %c0_i32_0 = arith.constant 0 : i32
    %c0_i32_1 = arith.constant 0 : i32
    return %c0_i32, %c0_i32_0 : i32, i32
  }
  func.func @transform_7(%arg0: i32) -> (i32, i32) {
    %c0_i32 = arith.constant 0 : i32
    %c0_i32_0 = arith.constant 0 : i32
    %c0_i32_1 = arith.constant 0 : i32
    return %c0_i32, %c0_i32_0 : i32, i32
  }
  func.func @transform_8(%arg0: i32) -> (i32, i32) {
    %c0_i32 = arith.constant 0 : i32
    %c0_i32_0 = arith.constant 0 : i32
    %c0_i32_1 = arith.constant 0 : i32
    return %c0_i32, %c0_i32_0 : i32, i32
  }
  func.func @transform_9(%arg0: i32) -> (i32, i32) {
    %c0_i32 = arith.constant 0 : i32
    %c0_i32_0 = arith.constant 0 : i32
    return %c0_i32, %arg0 : i32, i32
  }
}

</mosaic_0001>

<llo_original>
// kernel: tpu_custom_call.1
$region0: #{tpu_custom_call.1}
  #allocation0 [shape = 'u32[]', space=smem, size = 0x4, offset = 0x4, fixed_abs, tag = 'smem constant byte address 0x4 - core index']
  #allocation1 [shape = 'u32[144,128]{1,0:T(1,128)}', space=vmem, size = 0x12000, scoped, tag = 'internal scratch']
  #allocation2 [shape = 'f32[32,128]{1,0:T(8,128)}', space=vmem, size = 0x4000, scoped, tag = 'scratch operand']
  %s0 = inlined_call_operand.vmem [shape: f32[2,128], index: 0, kind: input, shape index: {}]
  %s1 = inlined_call_operand.vmem [shape: f32[32,32], index: 1, kind: input, shape index: {}]
  %s2 = inlined_call_operand.hbm [shape: f32[32,32], index: 2, kind: input, shape index: {}]
  %s3 = inlined_call_operand.hbm [shape: f32[32,32], index: 3, kind: input, shape index: {}]
  %s4 = inlined_call_operand.hbm [shape: f32[32,32], index: 4, kind: input, shape index: {}]
  %s5 = inlined_call_operand.hbm [shape: f32[32,32], index: 5, kind: input, shape index: {}]
  %s6 = inlined_call_operand.hbm [shape: f32[32,32], index: 6, kind: input, shape index: {}]
  %s7 = inlined_call_operand.vmem [shape: f32[32,6], index: 7, kind: input, shape index: {}]
  %s8 = inlined_call_operand.vmem [shape: f32[1,32], index: 8, kind: input, shape index: {}]
  %s9 = inlined_call_operand.hbm [shape: f32[1,128], index: 9, kind: output, shape index: {}]
  %s10 = sld [smem:[#allocation0]]
  $region66: #{tpu_custom_call.1} parent=0
    _
  %s12 = ssub.s32 1, %s10
  %s13 = scalar_select 0, %s12, %s10
  $region1: #{tpu_custom_call.1} parent=0
    #allocation3 [shape = 'u8[16384]{0}', space=vmem, size = 0x4000, scoped, tag = 'input window, operand 2, single buffered']
    #allocation4 [shape = 's32[1]{0}', space=sflag, size = 0x4, scoped, tag = 'scoped memory for tpu_custom_call.1']
    #allocation5 [shape = 's32[1]{0}', space=sflag, size = 0x4, scoped, tag = 'scoped memory for tpu_custom_call.1']
    #allocation6 [shape = 'u8[16384]{0}', space=vmem, size = 0x4000, scoped, tag = 'input window, operand 3, single buffered']
    #allocation7 [shape = 's32[1]{0}', space=sflag, size = 0x4, scoped, tag = 'scoped memory for tpu_custom_call.1']
    #allocation8 [shape = 'u8[16384]{0}', space=vmem, size = 0x4000, scoped, tag = 'input window, operand 4, single buffered']
    #allocation9 [shape = 'u8[16384]{0}', space=vmem, size = 0x4000, scoped, tag = 'input window, operand 5, single buffered']
    #allocation10 [shape = 's32[1]{0}', space=sflag, size = 0x4, scoped, tag = 'scoped memory for tpu_custom_call.1']
    #allocation11 [shape = 'u8[16384]{0}', space=vmem, size = 0x4000, scoped, tag = 'input window, operand 6, single buffered']
    #allocation12 [shape = 'u8[512]{0}', space=vmem, size = 0x400, scoped, tag = 'output window, operand 0, single buffered']
    %14 = vsyncpa [#allocation4], 0
    %15 = vsyncpa [#allocation7], 0
    %16 = vsyncpa [#allocation10], 0
    %17 = vsyncpa [#allocation5], 0
    // Predicated region
    $region2: #{tpu_custom_call.1} parent=1 // pred_check
      _
    $region3: #{tpu_custom_call.1} parent=1 // pred_check_branch
      %19 = sbr.rel (0) target = $region5
    $region4: #{tpu_custom_call.1} parent=1 // pred_region
      _
    $region5: #{tpu_custom_call.1} parent=1 // pred_fallthru
      _
    // Predicated region
    $region6: #{tpu_custom_call.1} parent=1 // pred_check
      _
    $region7: #{tpu_custom_call.1} parent=1 // pred_check_branch
      %21 = sbr.rel (0) target = $region9
    $region8: #{tpu_custom_call.1} parent=1 // pred_region
      _
    $region9: #{tpu_custom_call.1} parent=1 // pred_fallthru
      _
    // Predicated region
    $region10: #{tpu_custom_call.1} parent=1 // pred_check
      _
    $region11: #{tpu_custom_call.1} parent=1 // pred_check_branch
      %23 = sbr.rel (0) target = $region13
    $region12: #{tpu_custom_call.1} parent=1 // pred_region
      %s25 = ssub.s32 512, 512
      %26 = vsyncadd [#allocation4], %s25
      %s27 = sshll.u32 [#allocation3], 4
      %s28 = int_to_ptr.vmem [resolvable:$true] %s27
      %33 = dma.hbm_to_vmem [thread:$0]  %s2, 512, %s28, [#allocation4], 128, 128, 8
    $region13: #{tpu_custom_call.1} parent=1 // pred_fallthru
      _
    // Predicated region
    $region14: #{tpu_custom_call.1} parent=1 // pred_check
      _
    $region15: #{tpu_custom_call.1} parent=1 // pred_check_branch
      %35 = sbr.rel (0) target = $region17
    $region16: #{tpu_custom_call.1} parent=1 // pred_region
      %s37 = ssub.s32 512, 512
      %38 = vsyncadd [#allocation7], %s37
      %s39 = sshll.u32 [#allocation6], 4
      %s40 = int_to_ptr.vmem [resolvable:$true] %s39
      %45 = dma.hbm_to_vmem [thread:$0]  %s3, 512, %s40, [#allocation7], 128, 128, 8
    $region17: #{tpu_custom_call.1} parent=1 // pred_fallthru
      _
    // Predicated region
    $region18: #{tpu_custom_call.1} parent=1 // pred_check
      _
    $region19: #{tpu_custom_call.1} parent=1 // pred_check_branch
      %47 = sbr.rel (0) target = $region21
    $region20: #{tpu_custom_call.1} parent=1 // pred_region
      %s49 = ssub.s32 512, 512
      %50 = vsyncadd [#allocation7], %s49
      %s51 = sshll.u32 [#allocation8], 4
      %s52 = int_to_ptr.vmem [resolvable:$true] %s51
      %57 = dma.hbm_to_vmem [thread:$0]  %s4, 512, %s52, [#allocation7], 128, 128, 8
    $region21: #{tpu_custom_call.1} parent=1 // pred_fallthru
      _
    // Predicated region
    $region22: #{tpu_custom_call.1} parent=1 // pred_check
      _
    $region23: #{tpu_custom_call.1} parent=1 // pred_check_branch
      %59 = sbr.rel (0) target = $region25
    $region24: #{tpu_custom_call.1} parent=1 // pred_region
      %s61 = ssub.s32 512, 512
      %62 = vsyncadd [#allocation10], %s61
      %s63 = sshll.u32 [#allocation9], 4
      %s64 = int_to_ptr.vmem [resolvable:$true] %s63
      %69 = dma.hbm_to_vmem [thread:$0]  %s5, 512, %s64, [#allocation10], 128, 128, 8
    $region25: #{tpu_custom_call.1} parent=1 // pred_fallthru
      _
    // Predicated region
    $region26: #{tpu_custom_call.1} parent=1 // pred_check
      _
    $region27: #{tpu_custom_call.1} parent=1 // pred_check_branch
      %71 = sbr.rel (0) target = $region29
    $region28: #{tpu_custom_call.1} parent=1 // pred_region
      %s73 = ssub.s32 512, 512
      %74 = vsyncadd [#allocation10], %s73
      %s75 = sshll.u32 [#allocation11], 4
      %s76 = int_to_ptr.vmem [resolvable:$true] %s75
      %81 = dma.hbm_to_vmem [thread:$0]  %s6, 512, %s76, [#allocation10], 128, 128, 8
    $region29: #{tpu_custom_call.1} parent=1 // pred_fallthru
      _
    // Predicated region
    $region30: #{tpu_custom_call.1} parent=1 // pred_check
      _
    $region31: #{tpu_custom_call.1} parent=1 // pred_check_branch
      %83 = sbr.rel (0) target = $region33
    $region32: #{tpu_custom_call.1} parent=1 // pred_region
      _
    $region33: #{tpu_custom_call.1} parent=1 // pred_fallthru
      _
    // Predicated region
    $region34: #{tpu_custom_call.1} parent=1 // pred_check
      _
    $region35: #{tpu_custom_call.1} parent=1 // pred_check_branch
      %85 = sbr.rel (0) target = $region37
    $region36: #{tpu_custom_call.1} parent=1 // pred_region
      _
    $region37: #{tpu_custom_call.1} parent=1 // pred_fallthru
      _
    // Predicated region
    $region38: #{tpu_custom_call.1} parent=1 // pred_check
      _
    $region39: #{tpu_custom_call.1} parent=1 // pred_check_branch
      %87 = sbr.rel (0) target = $region41
    $region40: #{tpu_custom_call.1} parent=1 // pred_region
      %88 = dma.done [#allocation4], 512
    $region41: #{tpu_custom_call.1} parent=1 // pred_fallthru
      _
    // Predicated region
    $region42: #{tpu_custom_call.1} parent=1 // pred_check
      _
    $region43: #{tpu_custom_call.1} parent=1 // pred_check_branch
      %90 = sbr.rel (0) target = $region45
    $region44: #{tpu_custom_call.1} parent=1 // pred_region
      %91 = dma.done [#allocation7], 512
    $region45: #{tpu_custom_call.1} parent=1 // pred_fallthru
      _
    // Predicated region
    $region46: #{tpu_custom_call.1} parent=1 // pred_check
      _
    $region47: #{tpu_custom_call.1} parent=1 // pred_check_branch
      %93 = sbr.rel (0) target = $region49
    $region48: #{tpu_custom_call.1} parent=1 // pred_region
      %94 = dma.done [#allocation7], 512
    $region49: #{tpu_custom_call.1} parent=1 // pred_fallthru
      _
    // Predicated region
    $region50: #{tpu_custom_call.1} parent=1 // pred_check
      _
    $region51: #{tpu_custom_call.1} parent=1 // pred_check_branch
      %96 = sbr.rel (0) target = $region53
    $region52: #{tpu_custom_call.1} parent=1 // pred_region
      %97 = dma.done [#allocation10], 512
    $region53: #{tpu_custom_call.1} parent=1 // pred_fallthru
      _
    // Predicated region
    $region54: #{tpu_custom_call.1} parent=1 // pred_check
      _
    $region55: #{tpu_custom_call.1} parent=1 // pred_check_branch
      %99 = sbr.rel (0) target = $region57
    $region56: #{tpu_custom_call.1} parent=1 // pred_region
      %100 = dma.done [#allocation10], 512
    $region57: #{tpu_custom_call.1} parent=1 // pred_fallthru
      _
    %v101 = vld [vmem:[%s0] sm:$0x3]
    %102 = vst [vmem:[#allocation2] sm:$0xff] 0.0
    %103 = vst [vmem:[#allocation2 + $0x8] sm:$0xff] 0.0
    %104 = vst [vmem:[#allocation2 + $0x10] sm:$0xff] 0.0
    %105 = vst [vmem:[#allocation2 + $0x18] sm:$0xff] 0.0
    %106 = vst [vmem:[#allocation2] sm:$0x3] %v101
    %v107 = vld [vmem:[#allocation2] sm:$0xff]
    %v108 = vld [vmem:[#allocation2 + $0x8] sm:$0xff]
    %v109 = vld [vmem:[#allocation2 + $0x10] sm:$0xff]
    %v110 = vld [vmem:[#allocation2 + $0x18] sm:$0xff]
    %v111 = vld [vmem:[%s1] sm:$0xff]
    %v112 = vld [vmem:[%s1 + $0x8] sm:$0xff]
    %v113 = vld [vmem:[%s1 + $0x10] sm:$0xff]
    %v114 = vld [vmem:[%s1 + $0x18] sm:$0xff]
    %v115 = vld [vmem:[%s7] sm:$0xff]
    %v116 = vld [vmem:[%s7 + $0x8] sm:$0xff]
    %v117 = vld [vmem:[%s7 + $0x10] sm:$0xff]
    %v118 = vld [vmem:[%s7 + $0x18] sm:$0xff]
    %120 = vset.pattern.permute.xlu0 0
    %121 = vperm.xlu0 %120, %v115
    %v122 = vpop.permute.xlu0 %121
    %125 = vset.pattern.permute.xlu0 0
    %126 = vperm.xlu0 %125, %v116
    %v127 = vpop.permute.xlu0 %126
    %130 = vset.pattern.permute.xlu0 0
    %131 = vperm.xlu0 %130, %v117
    %v132 = vpop.permute.xlu0 %131
    %135 = vset.pattern.permute.xlu0 0
    %136 = vperm.xlu0 %135, %v118
    %v137 = vpop.permute.xlu0 %136
    %vm139 = vcmask 261120
    %v141 = vsel %vm139, %v111, 0
    %v144 = vsel %vm139, %v112, 0
    %v147 = vsel %vm139, %v113, 0
    %v150 = vsel %vm139, %v114, 0
    %152 = vmatprep.subr.mxu0 0.0
    %153 = vmatpush1.msra.mxu0 %v107
    %154 = vmatprep.subr.mxu0 0.0
    %155 = vmatpush1.msra.mxu0 %v108
    %156 = vmatprep.subr.mxu0 0.0
    %157 = vmatpush1.msra.mxu0 %v109
    %158 = vmatprep.subr.mxu0 0.0
    %159 = vmatpush1.msra.mxu0 %v110
    %160 = vmatprep.subr.mxu0 0.0
    %161 = vmatpush1.msra.mxu0 0.0
    %162 = vmatprep.subr.mxu0 0.0
    %163 = vmatpush1.msra.mxu0 0.0
    %164 = vmatprep.subr.mxu0 0.0
    %165 = vmatpush1.msra.mxu0 0.0
    %166 = vmatprep.subr.mxu0 0.0
    %167 = vmatpush1.msra.mxu0 0.0
    %168 = vmatprep.subr.mxu0 0.0
    %169 = vmatpush1.msra.mxu0 0.0
    %170 = vmatprep.subr.mxu0 0.0
    %171 = vmatpush1.msra.mxu0 0.0
    %172 = vmatprep.subr.mxu0 0.0
    %173 = vmatpush1.msra.mxu0 0.0
    %174 = vmatprep.subr.mxu0 0.0
    %175 = vmatpush1.msra.mxu0 0.0
    %176 = vmatprep.subr.mxu0 0.0
    %177 = vmatpush1.msra.mxu0 0.0
    %178 = vmatprep.subr.mxu0 0.0
    %179 = vmatpush1.msra.mxu0 0.0
    %180 = vmatprep.subr.mxu0 0.0
    %181 = vmatpush1.msra.mxu0 0.0
    %182 = vmatprep.subr.mxu0 0.0
    %183 = vmatpush1.msra.mxu0 0.0
    %184 = vmatprep.subr.mxu0 0.0
    %185 = vmatpush1.msra.mxu0 0.0
    %186 = vmatprep.subr.mxu0 0.0
    %187 = vmatpush1.msra.mxu0 0.0
    %188 = vmatprep.subr.mxu0 0.0
    %189 = vmatpush1.msra.mxu0 0.0
    %190 = vmatprep.subr.mxu0 0.0
    %191 = vmatpush1.msra.mxu0 0.0
    %192 = vmatprep.subr.mxu0 0.0
    %193 = vmatpush1.msra.mxu0 0.0
    %194 = vmatprep.subr.mxu0 0.0
    %195 = vmatpush1.msra.mxu0 0.0
    %196 = vmatprep.subr.mxu0 0.0
    %197 = vmatpush1.msra.mxu0 0.0
    %198 = vmatprep.subr.mxu0 0.0
    %199 = vmatpush1.msra.mxu0 0.0
    %200 = vmatprep.subr.mxu0 0.0
    %201 = vmatpush1.msra.mxu0 0.0
    %202 = vmatprep.subr.mxu0 0.0
    %203 = vmatpush1.msra.mxu0 0.0
    %204 = vmatprep.subr.mxu0 0.0
    %205 = vmatpush1.msra.mxu0 0.0
    %206 = vmatprep.subr.mxu0 0.0
    %207 = vmatpush1.msra.mxu0 0.0
    %208 = vmatprep.subr.mxu0 0.0
    %209 = vmatpush1.msra.mxu0 0.0
    %210 = vmatprep.subr.mxu0 0.0
    %211 = vmatpush1.msra.mxu0 0.0
    %212 = vmatprep.subr.mxu0 0.0
    %213 = vmatpush1.msra.mxu0 0.0
    %214 = vmatprep.subr.mxu0 0.0
    %215 = vmatpush1.msra.mxu0 0.0
    %216 = vmatprep.mubr.f32.mxu0 0.0
    %217 = vmatmul.mubr.f32.gmra.mrb[0].mxu0 %v141
    %v218 = vpop.f32.mrb[0].mxu0
    %v219 = vadd.f32 %v122, %v218
    %v220 = vpop.f32.mrb[0].mxu0
    %221 = vmatprep.mubr.f32.mxu0 0.0
    %222 = vmatmul.mubr.f32.gmra.mrb[0].mxu0 %v144
    %v223 = vpop.f32.mrb[0].mxu0
    %v224 = vadd.f32 %v127, %v223
    %v225 = vpop.f32.mrb[0].mxu0
    %226 = vmatprep.mubr.f32.mxu0 0.0
    %227 = vmatmul.mubr.f32.gmra.mrb[0].mxu0 %v147
    %v228 = vpop.f32.mrb[0].mxu0
    %v229 = vadd.f32 %v132, %v228
    %v230 = vpop.f32.mrb[0].mxu0
    %231 = vmatprep.mubr.f32.mxu0 0.0
    %232 = vmatmul.mubr.f32.gmra.mrb[0].mxu0 %v150
    %v233 = vpop.f32.mrb[0].mxu0
    %v234 = vadd.f32 %v137, %v233
    %v235 = vpop.f32.mrb[0].mxu0
    %236 = vdwg.mxu0
    %v237 = vmax.f32 %v219, 0.0
    %v238 = vmax.f32 %v224, 0.0
    %v239 = vmax.f32 %v229, 0.0
    %v240 = vmax.f32 %v234, 0.0
    %v241 = vld [vmem:[#allocation3] sm:$0xff]
    %v242 = vld [vmem:[#allocation3 + $0x8] sm:$0xff]
    %v243 = vld [vmem:[#allocation3 + $0x10] sm:$0xff]
    %v244 = vld [vmem:[#allocation3 + $0x18] sm:$0xff]
    %245 = vset.pattern.permute.xlu0 1
    %246 = vperm.xlu0 %245, %v115
    %v247 = vpop.permute.xlu0 %246
    %249 = vset.pattern.permute.xlu0 1
    %250 = vperm.xlu0 %249, %v116
    %v251 = vpop.permute.xlu0 %250
    %253 = vset.pattern.permute.xlu0 1
    %254 = vperm.xlu0 %253, %v117
    %v255 = vpop.permute.xlu0 %254
    %257 = vset.pattern.permute.xlu0 1
    %258 = vperm.xlu0 %257, %v118
    %v259 = vpop.permute.xlu0 %258
    %v262 = vsel %vm139, %v241, 0
    %v265 = vsel %vm139, %v242, 0
    %v268 = vsel %vm139, %v243, 0
    %v271 = vsel %vm139, %v244, 0
    %273 = vmatprep.subr.mxu0 0.0
    %274 = vmatpush1.msra.mxu0 %v237
    %275 = vmatprep.subr.mxu0 0.0
    %276 = vmatpush1.msra.mxu0 %v238
    %277 = vmatprep.subr.mxu0 0.0
    %278 = vmatpush1.msra.mxu0 %v239
    %279 = vmatprep.subr.mxu0 0.0
    %280 = vmatpush1.msra.mxu0 %v240
    %281 = vmatprep.subr.mxu0 0.0
    %282 = vmatpush1.msra.mxu0 0.0
    %283 = vmatprep.subr.mxu0 0.0
    %284 = vmatpush1.msra.mxu0 0.0
    %285 = vmatprep.subr.mxu0 0.0
    %286 = vmatpush1.msra.mxu0 0.0
    %287 = vmatprep.subr.mxu0 0.0
    %288 = vmatpush1.msra.mxu0 0.0
    %289 = vmatprep.subr.mxu0 0.0
    %290 = vmatpush1.msra.mxu0 0.0
    %291 = vmatprep.subr.mxu0 0.0
    %292 = vmatpush1.msra.mxu0 0.0
    %293 = vmatprep.subr.mxu0 0.0
    %294 = vmatpush1.msra.mxu0 0.0
    %295 = vmatprep.subr.mxu0 0.0
    %296 = vmatpush1.msra.mxu0 0.0
    %297 = vmatprep.subr.mxu0 0.0
    %298 = vmatpush1.msra.mxu0 0.0
    %299 = vmatprep.subr.mxu0 0.0
    %300 = vmatpush1.msra.mxu0 0.0
    %301 = vmatprep.subr.mxu0 0.0
    %302 = vmatpush1.msra.mxu0 0.0
    %303 = vmatprep.subr.mxu0 0.0
    %304 = vmatpush1.msra.mxu0 0.0
    %305 = vmatprep.subr.mxu0 0.0
    %306 = vmatpush1.msra.mxu0 0.0
    %307 = vmatprep.subr.mxu0 0.0
    %308 = vmatpush1.msra.mxu0 0.0
    %309 = vmatprep.subr.mxu0 0.0
    %310 = vmatpush1.msra.mxu0 0.0
    %311 = vmatprep.subr.mxu0 0.0
    %312 = vmatpush1.msra.mxu0 0.0
    %313 = vmatprep.subr.mxu0 0.0
    %314 = vmatpush1.msra.mxu0 0.0
    %315 = vmatprep.subr.mxu0 0.0
    %316 = vmatpush1.msra.mxu0 0.0
    %317 = vmatprep.subr.mxu0 0.0
    %318 = vmatpush1.msra.mxu0 0.0
    %319 = vmatprep.subr.mxu0 0.0
    %320 = vmatpush1.msra.mxu0 0.0
    %321 = vmatprep.subr.mxu0 0.0
    %322 = vmatpush1.msra.mxu0 0.0
    %323 = vmatprep.subr.mxu0 0.0
    %324 = vmatpush1.msra.mxu0 0.0
    %325 = vmatprep.subr.mxu0 0.0
    %326 = vmatpush1.msra.mxu0 0.0
    %327 = vmatprep.subr.mxu0 0.0
    %328 = vmatpush1.msra.mxu0 0.0
    %329 = vmatprep.subr.mxu0 0.0
    %330 = vmatpush1.msra.mxu0 0.0
    %331 = vmatprep.subr.mxu0 0.0
    %332 = vmatpush1.msra.mxu0 0.0
    %333 = vmatprep.subr.mxu0 0.0
    %334 = vmatpush1.msra.mxu0 0.0
    %335 = vmatprep.subr.mxu0 0.0
    %336 = vmatpush1.msra.mxu0 0.0
    %337 = vmatprep.mubr.f32.mxu0 0.0
    %338 = vmatmul.mubr.f32.gmra.mrb[0].mxu0 %v262
    %v339 = vpop.f32.mrb[0].mxu0
    %v340 = vadd.f32 %v247, %v339
    %v341 = vpop.f32.mrb[0].mxu0
    %342 = vmatprep.mubr.f32.mxu0 0.0
    %343 = vmatmul.mubr.f32.gmra.mrb[0].mxu0 %v265
    %v344 = vpop.f32.mrb[0].mxu0
    %v345 = vadd.f32 %v251, %v344
    %v346 = vpop.f32.mrb[0].mxu0
    %347 = vmatprep.mubr.f32.mxu0 0.0
    %348 = vmatmul.mubr.f32.gmra.mrb[0].mxu0 %v268
    %v349 = vpop.f32.mrb[0].mxu0
    %v350 = vadd.f32 %v255, %v349
    %v351 = vpop.f32.mrb[0].mxu0
    %352 = vmatprep.mubr.f32.mxu0 0.0
    %353 = vmatmul.mubr.f32.gmra.mrb[0].mxu0 %v271
    %v354 = vpop.f32.mrb[0].mxu0
    %v355 = vadd.f32 %v259, %v354
    %v356 = vpop.f32.mrb[0].mxu0
    %357 = vdwg.mxu0
    %v358 = vmax.f32 %v340, 0.0
    %v359 = vmax.f32 %v345, 0.0
    %v360 = vmax.f32 %v350, 0.0
    %v361 = vmax.f32 %v355, 0.0
    %v362 = vadd.f32 %v358, %v107
    %v363 = vadd.f32 %v359, %v108
    %v364 = vadd.f32 %v360, %v109
    %v365 = vadd.f32 %v361, %v110
    %v366 = vld [vmem:[#allocation6] sm:$0xff]
    %v367 = vld [vmem:[#allocation6 + $0x8] sm:$0xff]
    %v368 = vld [vmem:[#allocation6 + $0x10] sm:$0xff]
    %v369 = vld [vmem:[#allocation6 + $0x18] sm:$0xff]
    %370 = vset.pattern.permute.xlu0 2
    %371 = vperm.xlu0 %370, %v115
    %v372 = vpop.permute.xlu0 %371
    %374 = vset.pattern.permute.xlu0 2
    %375 = vperm.xlu0 %374, %v116
    %v376 = vpop.permute.xlu0 %375
    %378 = vset.pattern.permute.xlu0 2
    %379 = vperm.xlu0 %378, %v117
    %v380 = vpop.permute.xlu0 %379
    %382 = vset.pattern.permute.xlu0 2
    %383 = vperm.xlu0 %382, %v118
    %v384 = vpop.permute.xlu0 %383
    %v387 = vsel %vm139, %v366, 0
    %v390 = vsel %vm139, %v367, 0
    %v393 = vsel %vm139, %v368, 0
    %v396 = vsel %vm139, %v369, 0
    %398 = vmatprep.subr.mxu0 0.0
    %399 = vmatpush1.msra.mxu0 %v362
    %400 = vmatprep.subr.mxu0 0.0
    %401 = vmatpush1.msra.mxu0 %v363
    %402 = vmatprep.subr.mxu0 0.0
    %403 = vmatpush1.msra.mxu0 %v364
    %404 = vmatprep.subr.mxu0 0.0
    %405 = vmatpush1.msra.mxu0 %v365
    %406 = vmatprep.subr.mxu0 0.0
    %407 = vmatpush1.msra.mxu0 0.0
    %408 = vmatprep.subr.mxu0 0.0
    %409 = vmatpush1.msra.mxu0 0.0
    %410 = vmatprep.subr.mxu0 0.0
    %411 = vmatpush1.msra.mxu0 0.0
    %412 = vmatprep.subr.mxu0 0.0
    %413 = vmatpush1.msra.mxu0 0.0
    %414 = vmatprep.subr.mxu0 0.0
    %415 = vmatpush1.msra.mxu0 0.0
    %416 = vmatprep.subr.mxu0 0.0
    %417 = vmatpush1.msra.mxu0 0.0
    %418 = vmatprep.subr.mxu0 0.0
    %419 = vmatpush1.msra.mxu0 0.0
    %420 = vmatprep.subr.mxu0 0.0
    %421 = vmatpush1.msra.mxu0 0.0
    %422 = vmatprep.subr.mxu0 0.0
    %423 = vmatpush1.msra.mxu0 0.0
    %424 = vmatprep.subr.mxu0 0.0
    %425 = vmatpush1.msra.mxu0 0.0
    %426 = vmatprep.subr.mxu0 0.0
    %427 = vmatpush1.msra.mxu0 0.0
    %428 = vmatprep.subr.mxu0 0.0
    %429 = vmatpush1.msra.mxu0 0.0
    %430 = vmatprep.subr.mxu0 0.0
    %431 = vmatpush1.msra.mxu0 0.0
    %432 = vmatprep.subr.mxu0 0.0
    %433 = vmatpush1.msra.mxu0 0.0
    %434 = vmatprep.subr.mxu0 0.0
    %435 = vmatpush1.msra.mxu0 0.0
    %436 = vmatprep.subr.mxu0 0.0
    %437 = vmatpush1.msra.mxu0 0.0
    %438 = vmatprep.subr.mxu0 0.0
    %439 = vmatpush1.msra.mxu0 0.0
    %440 = vmatprep.subr.mxu0 0.0
    %441 = vmatpush1.msra.mxu0 0.0
    %442 = vmatprep.subr.mxu0 0.0
    %443 = vmatpush1.msra.mxu0 0.0
    %444 = vmatprep.subr.mxu0 0.0
    %445 = vmatpush1.msra.mxu0 0.0
    %446 = vmatprep.subr.mxu0 0.0
    %447 = vmatpush1.msra.mxu0 0.0
    %448 = vmatprep.subr.mxu0 0.0
    %449 = vmatpush1.msra.mxu0 0.0
    %450 = vmatprep.subr.mxu0 0.0
    %451 = vmatpush1.msra.mxu0 0.0
    %452 = vmatprep.subr.mxu0 0.0
    %453 = vmatpush1.msra.mxu0 0.0
    %454 = vmatprep.subr.mxu0 0.0
    %455 = vmatpush1.msra.mxu0 0.0
    %456 = vmatprep.subr.mxu0 0.0
    %457 = vmatpush1.msra.mxu0 0.0
    %458 = vmatprep.subr.mxu0 0.0
    %459 = vmatpush1.msra.mxu0 0.0
    %460 = vmatprep.subr.mxu0 0.0
    %461 = vmatpush1.msra.mxu0 0.0
    %462 = vmatprep.mubr.f32.mxu0 0.0
    %463 = vmatmul.mubr.f32.gmra.mrb[0].mxu0 %v387
    %v464 = vpop.f32.mrb[0].mxu0
    %v465 = vadd.f32 %v372, %v464
    %v466 = vpop.f32.mrb[0].mxu0
    %467 = vmatprep.mubr.f32.mxu0 0.0
    %468 = vmatmul.mubr.f32.gmra.mrb[0].mxu0 %v390
    %v469 = vpop.f32.mrb[0].mxu0
    %v470 = vadd.f32 %v376, %v469
    %v471 = vpop.f32.mrb[0].mxu0
    %472 = vmatprep.mubr.f32.mxu0 0.0
    %473 = vmatmul.mubr.f32.gmra.mrb[0].mxu0 %v393
    %v474 = vpop.f32.mrb[0].mxu0
    %v475 = vadd.f32 %v380, %v474
    %v476 = vpop.f32.mrb[0].mxu0
    %477 = vmatprep.mubr.f32.mxu0 0.0
    %478 = vmatmul.mubr.f32.gmra.mrb[0].mxu0 %v396
    %v479 = vpop.f32.mrb[0].mxu0
    %v480 = vadd.f32 %v384, %v479
    %v481 = vpop.f32.mrb[0].mxu0
    %482 = vdwg.mxu0
    %v483 = vmax.f32 %v465, 0.0
    %v484 = vmax.f32 %v470, 0.0
    %v485 = vmax.f32 %v475, 0.0
    %v486 = vmax.f32 %v480, 0.0
    %v487 = vld [vmem:[#allocation8] sm:$0xff]
    %v488 = vld [vmem:[#allocation8 + $0x8] sm:$0xff]
    %v489 = vld [vmem:[#allocation8 + $0x10] sm:$0xff]
    %v490 = vld [vmem:[#allocation8 + $0x18] sm:$0xff]
    %491 = vset.pattern.permute.xlu0 3
    %492 = vperm.xlu0 %491, %v115
    %v493 = vpop.permute.xlu0 %492
    %495 = vset.pattern.permute.xlu0 3
    %496 = vperm.xlu0 %495, %v116
    %v497 = vpop.permute.xlu0 %496
    %499 = vset.pattern.permute.xlu0 3
    %500 = vperm.xlu0 %499, %v117
    %v501 = vpop.permute.xlu0 %500
    %503 = vset.pattern.permute.xlu0 3
    %504 = vperm.xlu0 %503, %v118
    %v505 = vpop.permute.xlu0 %504
    %v508 = vsel %vm139, %v487, 0
    %v511 = vsel %vm139, %v488, 0
    %v514 = vsel %vm139, %v489, 0
    %v517 = vsel %vm139, %v490, 0
    %519 = vmatprep.subr.mxu0 0.0
    %520 = vmatpush1.msra.mxu0 %v483
    %521 = vmatprep.subr.mxu0 0.0
    %522 = vmatpush1.msra.mxu0 %v484
    %523 = vmatprep.subr.mxu0 0.0
    %524 = vmatpush1.msra.mxu0 %v485
    %525 = vmatprep.subr.mxu0 0.0
    %526 = vmatpush1.msra.mxu0 %v486
    %527 = vmatprep.subr.mxu0 0.0
    %528 = vmatpush1.msra.mxu0 0.0
    %529 = vmatprep.subr.mxu0 0.0
    %530 = vmatpush1.msra.mxu0 0.0
    %531 = vmatprep.subr.mxu0 0.0
    %532 = vmatpush1.msra.mxu0 0.0
    %533 = vmatprep.subr.mxu0 0.0
    %534 = vmatpush1.msra.mxu0 0.0
    %535 = vmatprep.subr.mxu0 0.0
    %536 = vmatpush1.msra.mxu0 0.0
    %537 = vmatprep.subr.mxu0 0.0
    %538 = vmatpush1.msra.mxu0 0.0
    %539 = vmatprep.subr.mxu0 0.0
    %540 = vmatpush1.msra.mxu0 0.0
    %541 = vmatprep.subr.mxu0 0.0
    %542 = vmatpush1.msra.mxu0 0.0
    %543 = vmatprep.subr.mxu0 0.0
    %544 = vmatpush1.msra.mxu0 0.0
    %545 = vmatprep.subr.mxu0 0.0
    %546 = vmatpush1.msra.mxu0 0.0
    %547 = vmatprep.subr.mxu0 0.0
    %548 = vmatpush1.msra.mxu0 0.0
    %549 = vmatprep.subr.mxu0 0.0
    %550 = vmatpush1.msra.mxu0 0.0
    %551 = vmatprep.subr.mxu0 0.0
    %552 = vmatpush1.msra.mxu0 0.0
    %553 = vmatprep.subr.mxu0 0.0
    %554 = vmatpush1.msra.mxu0 0.0
    %555 = vmatprep.subr.mxu0 0.0
    %556 = vmatpush1.msra.mxu0 0.0
    %557 = vmatprep.subr.mxu0 0.0
    %558 = vmatpush1.msra.mxu0 0.0
    %559 = vmatprep.subr.mxu0 0.0
    %560 = vmatpush1.msra.mxu0 0.0
    %561 = vmatprep.subr.mxu0 0.0
    %562 = vmatpush1.msra.mxu0 0.0
    %563 = vmatprep.subr.mxu0 0.0
    %564 = vmatpush1.msra.mxu0 0.0
    %565 = vmatprep.subr.mxu0 0.0
    %566 = vmatpush1.msra.mxu0 0.0
    %567 = vmatprep.subr.mxu0 0.0
    %568 = vmatpush1.msra.mxu0 0.0
    %569 = vmatprep.subr.mxu0 0.0
    %570 = vmatpush1.msra.mxu0 0.0
    %571 = vmatprep.subr.mxu0 0.0
    %572 = vmatpush1.msra.mxu0 0.0
    %573 = vmatprep.subr.mxu0 0.0
    %574 = vmatpush1.msra.mxu0 0.0
    %575 = vmatprep.subr.mxu0 0.0
    %576 = vmatpush1.msra.mxu0 0.0
    %577 = vmatprep.subr.mxu0 0.0
    %578 = vmatpush1.msra.mxu0 0.0
    %579 = vmatprep.subr.mxu0 0.0
    %580 = vmatpush1.msra.mxu0 0.0
    %581 = vmatprep.subr.mxu0 0.0
    %582 = vmatpush1.msra.mxu0 0.0
    %583 = vmatprep.mubr.f32.mxu0 0.0
    %584 = vmatmul.mubr.f32.gmra.mrb[0].mxu0 %v508
    %v585 = vpop.f32.mrb[0].mxu0
    %v586 = vadd.f32 %v493, %v585
    %v587 = vpop.f32.mrb[0].mxu0
    %588 = vmatprep.mubr.f32.mxu0 0.0
    %589 = vmatmul.mubr.f32.gmra.mrb[0].mxu0 %v511
    %v590 = vpop.f32.mrb[0].mxu0
    %v591 = vadd.f32 %v497, %v590
    %v592 = vpop.f32.mrb[0].mxu0
    %593 = vmatprep.mubr.f32.mxu0 0.0
    %594 = vmatmul.mubr.f32.gmra.mrb[0].mxu0 %v514
    %v595 = vpop.f32.mrb[0].mxu0
    %v596 = vadd.f32 %v501, %v595
    %v597 = vpop.f32.mrb[0].mxu0
    %598 = vmatprep.mubr.f32.mxu0 0.0
    %599 = vmatmul.mubr.f32.gmra.mrb[0].mxu0 %v517
    %v600 = vpop.f32.mrb[0].mxu0
    %v601 = vadd.f32 %v505, %v600
    %v602 = vpop.f32.mrb[0].mxu0
    %603 = vdwg.mxu0
    %v604 = vmax.f32 %v586, 0.0
    %v605 = vmax.f32 %v591, 0.0
    %v606 = vmax.f32 %v596, 0.0
    %v607 = vmax.f32 %v601, 0.0
    %v608 = vadd.f32 %v604, %v362
    %v609 = vadd.f32 %v605, %v363
    %v610 = vadd.f32 %v606, %v364
    %v611 = vadd.f32 %v607, %v365
    %v612 = vld [vmem:[#allocation9] sm:$0xff]
    %v613 = vld [vmem:[#allocation9 + $0x8] sm:$0xff]
    %v614 = vld [vmem:[#allocation9 + $0x10] sm:$0xff]
    %v615 = vld [vmem:[#allocation9 + $0x18] sm:$0xff]
    %616 = vset.pattern.permute.xlu0 4
    %617 = vperm.xlu0 %616, %v115
    %v618 = vpop.permute.xlu0 %617
    %620 = vset.pattern.permute.xlu0 4
    %621 = vperm.xlu0 %620, %v116
    %v622 = vpop.permute.xlu0 %621
    %624 = vset.pattern.permute.xlu0 4
    %625 = vperm.xlu0 %624, %v117
    %v626 = vpop.permute.xlu0 %625
    %628 = vset.pattern.permute.xlu0 4
    %629 = vperm.xlu0 %628, %v118
    %v630 = vpop.permute.xlu0 %629
    %v633 = vsel %vm139, %v612, 0
    %v636 = vsel %vm139, %v613, 0
    %v639 = vsel %vm139, %v614, 0
    %v642 = vsel %vm139, %v615, 0
    %644 = vmatprep.subr.mxu0 0.0
    %645 = vmatpush1.msra.mxu0 %v608
    %646 = vmatprep.subr.mxu0 0.0
    %647 = vmatpush1.msra.mxu0 %v609
    %648 = vmatprep.subr.mxu0 0.0
    %649 = vmatpush1.msra.mxu0 %v610
    %650 = vmatprep.subr.mxu0 0.0
    %651 = vmatpush1.msra.mxu0 %v611
    %652 = vmatprep.subr.mxu0 0.0
    %653 = vmatpush1.msra.mxu0 0.0
    %654 = vmatprep.subr.mxu0 0.0
    %655 = vmatpush1.msra.mxu0 0.0
    %656 = vmatprep.subr.mxu0 0.0
    %657 = vmatpush1.msra.mxu0 0.0
    %658 = vmatprep.subr.mxu0 0.0
    %659 = vmatpush1.msra.mxu0 0.0
    %660 = vmatprep.subr.mxu0 0.0
    %661 = vmatpush1.msra.mxu0 0.0
    %662 = vmatprep.subr.mxu0 0.0
    %663 = vmatpush1.msra.mxu0 0.0
    %664 = vmatprep.subr.mxu0 0.0
    %665 = vmatpush1.msra.mxu0 0.0
    %666 = vmatprep.subr.mxu0 0.0
    %667 = vmatpush1.msra.mxu0 0.0
    %668 = vmatprep.subr.mxu0 0.0
    %669 = vmatpush1.msra.mxu0 0.0
    %670 = vmatprep.subr.mxu0 0.0
    %671 = vmatpush1.msra.mxu0 0.0
    %672 = vmatprep.subr.mxu0 0.0
    %673 = vmatpush1.msra.mxu0 0.0
    %674 = vmatprep.subr.mxu0 0.0
    %675 = vmatpush1.msra.mxu0 0.0
    %676 = vmatprep.subr.mxu0 0.0
    %677 = vmatpush1.msra.mxu0 0.0
    %678 = vmatprep.subr.mxu0 0.0
    %679 = vmatpush1.msra.mxu0 0.0
    %680 = vmatprep.subr.mxu0 0.0
    %681 = vmatpush1.msra.mxu0 0.0
    %682 = vmatprep.subr.mxu0 0.0
    %683 = vmatpush1.msra.mxu0 0.0
    %684 = vmatprep.subr.mxu0 0.0
    %685 = vmatpush1.msra.mxu0 0.0
    %686 = vmatprep.subr.mxu0 0.0
    %687 = vmatpush1.msra.mxu0 0.0
    %688 = vmatprep.subr.mxu0 0.0
    %689 = vmatpush1.msra.mxu0 0.0
    %690 = vmatprep.subr.mxu0 0.0
    %691 = vmatpush1.msra.mxu0 0.0
    %692 = vmatprep.subr.mxu0 0.0
    %693 = vmatpush1.msra.mxu0 0.0
    %694 = vmatprep.subr.mxu0 0.0
    %695 = vmatpush1.msra.mxu0 0.0
    %696 = vmatprep.subr.mxu0 0.0
    %697 = vmatpush1.msra.mxu0 0.0
    %698 = vmatprep.subr.mxu0 0.0
    %699 = vmatpush1.msra.mxu0 0.0
    %700 = vmatprep.subr.mxu0 0.0
    %701 = vmatpush1.msra.mxu0 0.0
    %702 = vmatprep.subr.mxu0 0.0
    %703 = vmatpush1.msra.mxu0 0.0
    %704 = vmatprep.subr.mxu0 0.0
    %705 = vmatpush1.msra.mxu0 0.0
    %706 = vmatprep.subr.mxu0 0.0
    %707 = vmatpush1.msra.mxu0 0.0
    %708 = vmatprep.mubr.f32.mxu0 0.0
    %709 = vmatmul.mubr.f32.gmra.mrb[0].mxu0 %v633
    %v710 = vpop.f32.mrb[0].mxu0
    %v711 = vadd.f32 %v618, %v710
    %v712 = vpop.f32.mrb[0].mxu0
    %713 = vmatprep.mubr.f32.mxu0 0.0
    %714 = vmatmul.mubr.f32.gmra.mrb[0].mxu0 %v636
    %v715 = vpop.f32.mrb[0].mxu0
    %v716 = vadd.f32 %v622, %v715
    %v717 = vpop.f32.mrb[0].mxu0
    %718 = vmatprep.mubr.f32.mxu0 0.0
    %719 = vmatmul.mubr.f32.gmra.mrb[0].mxu0 %v639
    %v720 = vpop.f32.mrb[0].mxu0
    %v721 = vadd.f32 %v626, %v720
    %v722 = vpop.f32.mrb[0].mxu0
    %723 = vmatprep.mubr.f32.mxu0 0.0
    %724 = vmatmul.mubr.f32.gmra.mrb[0].mxu0 %v642
    %v725 = vpop.f32.mrb[0].mxu0
    %v726 = vadd.f32 %v630, %v725
    %v727 = vpop.f32.mrb[0].mxu0
    %728 = vdwg.mxu0
    %v729 = vmax.f32 %v711, 0.0
    %v730 = vmax.f32 %v716, 0.0
    %v731 = vmax.f32 %v721, 0.0
    %v732 = vmax.f32 %v726, 0.0
    %v733 = vld [vmem:[#allocation11] sm:$0xff]
    %v734 = vld [vmem:[#allocation11 + $0x8] sm:$0xff]
    %v735 = vld [vmem:[#allocation11 + $0x10] sm:$0xff]
    %v736 = vld [vmem:[#allocation11 + $0x18] sm:$0xff]
    %737 = vset.pattern.permute.xlu0 5
    %738 = vperm.xlu0 %737, %v115
    %v739 = vpop.permute.xlu0 %738
    %741 = vset.pattern.permute.xlu0 5
    %742 = vperm.xlu0 %741, %v116
    %v743 = vpop.permute.xlu0 %742
    %745 = vset.pattern.permute.xlu0 5
    %746 = vperm.xlu0 %745, %v117
    %v747 = vpop.permute.xlu0 %746
    %749 = vset.pattern.permute.xlu0 5
    %750 = vperm.xlu0 %749, %v118
    %v751 = vpop.permute.xlu0 %750
    %v754 = vsel %vm139, %v733, 0
    %v757 = vsel %vm139, %v734, 0
    %v760 = vsel %vm139, %v735, 0
    %v763 = vsel %vm139, %v736, 0
    %765 = vmatprep.subr.mxu0 0.0
    %766 = vmatpush1.msra.mxu0 %v729
    %767 = vmatprep.subr.mxu0 0.0
    %768 = vmatpush1.msra.mxu0 %v730
    %769 = vmatprep.subr.mxu0 0.0
    %770 = vmatpush1.msra.mxu0 %v731
    %771 = vmatprep.subr.mxu0 0.0
    %772 = vmatpush1.msra.mxu0 %v732
    %773 = vmatprep.subr.mxu0 0.0
    %774 = vmatpush1.msra.mxu0 0.0
    %775 = vmatprep.subr.mxu0 0.0
    %776 = vmatpush1.msra.mxu0 0.0
    %777 = vmatprep.subr.mxu0 0.0
    %778 = vmatpush1.msra.mxu0 0.0
    %779 = vmatprep.subr.mxu0 0.0
    %780 = vmatpush1.msra.mxu0 0.0
    %781 = vmatprep.subr.mxu0 0.0
    %782 = vmatpush1.msra.mxu0 0.0
    %783 = vmatprep.subr.mxu0 0.0
    %784 = vmatpush1.msra.mxu0 0.0
    %785 = vmatprep.subr.mxu0 0.0
    %786 = vmatpush1.msra.mxu0 0.0
    %787 = vmatprep.subr.mxu0 0.0
    %788 = vmatpush1.msra.mxu0 0.0
    %789 = vmatprep.subr.mxu0 0.0
    %790 = vmatpush1.msra.mxu0 0.0
    %791 = vmatprep.subr.mxu0 0.0
    %792 = vmatpush1.msra.mxu0 0.0
    %793 = vmatprep.subr.mxu0 0.0
    %794 = vmatpush1.msra.mxu0 0.0
    %795 = vmatprep.subr.mxu0 0.0
    %796 = vmatpush1.msra.mxu0 0.0
    %797 = vmatprep.subr.mxu0 0.0
    %798 = vmatpush1.msra.mxu0 0.0
    %799 = vmatprep.subr.mxu0 0.0
    %800 = vmatpush1.msra.mxu0 0.0
    %801 = vmatprep.subr.mxu0 0.0
    %802 = vmatpush1.msra.mxu0 0.0
    %803 = vmatprep.subr.mxu0 0.0
    %804 = vmatpush1.msra.mxu0 0.0
    %805 = vmatprep.subr.mxu0 0.0
    %806 = vmatpush1.msra.mxu0 0.0
    %807 = vmatprep.subr.mxu0 0.0
    %808 = vmatpush1.msra.mxu0 0.0
    %809 = vmatprep.subr.mxu0 0.0
    %810 = vmatpush1.msra.mxu0 0.0
    %811 = vmatprep.subr.mxu0 0.0
    %812 = vmatpush1.msra.mxu0 0.0
    %813 = vmatprep.subr.mxu0 0.0
    %814 = vmatpush1.msra.mxu0 0.0
    %815 = vmatprep.subr.mxu0 0.0
    %816 = vmatpush1.msra.mxu0 0.0
    %817 = vmatprep.subr.mxu0 0.0
    %818 = vmatpush1.msra.mxu0 0.0
    %819 = vmatprep.subr.mxu0 0.0
    %820 = vmatpush1.msra.mxu0 0.0
    %821 = vmatprep.subr.mxu0 0.0
    %822 = vmatpush1.msra.mxu0 0.0
    %823 = vmatprep.subr.mxu0 0.0
    %824 = vmatpush1.msra.mxu0 0.0
    %825 = vmatprep.subr.mxu0 0.0
    %826 = vmatpush1.msra.mxu0 0.0
    %827 = vmatprep.subr.mxu0 0.0
    %828 = vmatpush1.msra.mxu0 0.0
    %829 = vmatprep.mubr.f32.mxu0 0.0
    %830 = vmatmul.mubr.f32.gmra.mrb[0].mxu0 %v754
    %v831 = vpop.f32.mrb[0].mxu0
    %v832 = vadd.f32 %v739, %v831
    %v833 = vpop.f32.mrb[0].mxu0
    %834 = vmatprep.mubr.f32.mxu0 0.0
    %835 = vmatmul.mubr.f32.gmra.mrb[0].mxu0 %v757
    %v836 = vpop.f32.mrb[0].mxu0
    %v837 = vadd.f32 %v743, %v836
    %v838 = vpop.f32.mrb[0].mxu0
    %839 = vmatprep.mubr.f32.mxu0 0.0
    %840 = vmatmul.mubr.f32.gmra.mrb[0].mxu0 %v760
    %v841 = vpop.f32.mrb[0].mxu0
    %v842 = vadd.f32 %v747, %v841
    %v843 = vpop.f32.mrb[0].mxu0
    %844 = vmatprep.mubr.f32.mxu0 0.0
    %845 = vmatmul.mubr.f32.gmra.mrb[0].mxu0 %v763
    %v846 = vpop.f32.mrb[0].mxu0
    %v847 = vadd.f32 %v751, %v846
    %v848 = vpop.f32.mrb[0].mxu0
    %849 = vdwg.mxu0
    %v850 = vmax.f32 %v832, 0.0
    %v851 = vmax.f32 %v837, 0.0
    %v852 = vmax.f32 %v842, 0.0
    %v853 = vmax.f32 %v847, 0.0
    %v854 = vadd.f32 %v850, %v608
    %v855 = vadd.f32 %v851, %v609
    %v856 = vadd.f32 %v852, %v610
    %v857 = vadd.f32 %v853, %v611
    %v858 = vld [vmem:[%s8] sm:$0x1]
    %v860 = vsel %vm139, %v858, 0
    %862 = vmatprep.subr.mxu0 0.0
    %863 = vmatpush1.msra.mxu0 %v854
    %864 = vmatprep.subr.mxu0 0.0
    %865 = vmatpush1.msra.mxu0 %v855
    %866 = vmatprep.subr.mxu0 0.0
    %867 = vmatpush1.msra.mxu0 %v856
    %868 = vmatprep.subr.mxu0 0.0
    %869 = vmatpush1.msra.mxu0 %v857
    %870 = vmatprep.subr.mxu0 0.0
    %871 = vmatpush1.msra.mxu0 0.0
    %872 = vmatprep.subr.mxu0 0.0
    %873 = vmatpush1.msra.mxu0 0.0
    %874 = vmatprep.subr.mxu0 0.0
    %875 = vmatpush1.msra.mxu0 0.0
    %876 = vmatprep.subr.mxu0 0.0
    %877 = vmatpush1.msra.mxu0 0.0
    %878 = vmatprep.subr.mxu0 0.0
    %879 = vmatpush1.msra.mxu0 0.0
    %880 = vmatprep.subr.mxu0 0.0
    %881 = vmatpush1.msra.mxu0 0.0
    %882 = vmatprep.subr.mxu0 0.0
    %883 = vmatpush1.msra.mxu0 0.0
    %884 = vmatprep.subr.mxu0 0.0
    %885 = vmatpush1.msra.mxu0 0.0
    %886 = vmatprep.subr.mxu0 0.0
    %887 = vmatpush1.msra.mxu0 0.0
    %888 = vmatprep.subr.mxu0 0.0
    %889 = vmatpush1.msra.mxu0 0.0
    %890 = vmatprep.subr.mxu0 0.0
    %891 = vmatpush1.msra.mxu0 0.0
    %892 = vmatprep.subr.mxu0 0.0
    %893 = vmatpush1.msra.mxu0 0.0
    %894 = vmatprep.subr.mxu0 0.0
    %895 = vmatpush1.msra.mxu0 0.0
    %896 = vmatprep.subr.mxu0 0.0
    %897 = vmatpush1.msra.mxu0 0.0
    %898 = vmatprep.subr.mxu0 0.0
    %899 = vmatpush1.msra.mxu0 0.0
    %900 = vmatprep.subr.mxu0 0.0
    %901 = vmatpush1.msra.mxu0 0.0
    %902 = vmatprep.subr.mxu0 0.0
    %903 = vmatpush1.msra.mxu0 0.0
    %904 = vmatprep.subr.mxu0 0.0
    %905 = vmatpush1.msra.mxu0 0.0
    %906 = vmatprep.subr.mxu0 0.0
    %907 = vmatpush1.msra.mxu0 0.0
    %908 = vmatprep.subr.mxu0 0.0
    %909 = vmatpush1.msra.mxu0 0.0
    %910 = vmatprep.subr.mxu0 0.0
    %911 = vmatpush1.msra.mxu0 0.0
    %912 = vmatprep.subr.mxu0 0.0
    %913 = vmatpush1.msra.mxu0 0.0
    %914 = vmatprep.subr.mxu0 0.0
    %915 = vmatpush1.msra.mxu0 0.0
    %916 = vmatprep.subr.mxu0 0.0
    %917 = vmatpush1.msra.mxu0 0.0
    %918 = vmatprep.subr.mxu0 0.0
    %919 = vmatpush1.msra.mxu0 0.0
    %920 = vmatprep.subr.mxu0 0.0
    %921 = vmatpush1.msra.mxu0 0.0
    %922 = vmatprep.subr.mxu0 0.0
    %923 = vmatpush1.msra.mxu0 0.0
    %924 = vmatprep.subr.mxu0 0.0
    %925 = vmatpush1.msra.mxu0 0.0
    %926 = vmatprep.mubr.f32.mxu0 0.0
    %927 = vmatmul.mubr.f32.gmra.mrb[0].mxu0 %v860
    %v928 = vpop.f32.mrb[0].mxu0
    %v929 = vadd.f32 0.0, %v928
    %v930 = vpop.f32.mrb[0].mxu0
    %931 = vdwg.mxu0
    %932 = vst [vmem:[#allocation12] sm:$0x1] %v929
    // Predicated region
    $region58: #{tpu_custom_call.1} parent=1 // pred_check
      _
    $region59: #{tpu_custom_call.1} parent=1 // pred_check_branch
      %934 = sbr.rel (0) target = $region61
    $region60: #{tpu_custom_call.1} parent=1 // pred_region
      %s936 = ssub.s32 16, 16
      %937 = vsyncadd [#allocation5], %s936
      %s939 = sshll.u32 [#allocation12], 4
      %s940 = int_to_ptr.vmem [resolvable:$true] %s939
      %942 = dma.vmem_to_hbm [thread:$0]  %s940, 16, %s9, [#allocation5]
    $region61: #{tpu_custom_call.1} parent=1 // pred_fallthru
      _
    // Predicated region
    $region62: #{tpu_custom_call.1} parent=1 // pred_check
      _
    $region63: #{tpu_custom_call.1} parent=1 // pred_check_branch
      %944 = sbr.rel (0) target = $region65
    $region64: #{tpu_custom_call.1} parent=1 // pred_region
      %945 = dma.done [#allocation5], 16
    $region65: #{tpu_custom_call.1} parent=1 // pred_fallthru
      _
    %946 = vsyncpa [#allocation4], 1
    %947 = vsyncpa [#allocation7], 1
    %948 = vsyncpa [#allocation10], 1
    %949 = vsyncpa [#allocation5], 1

</llo_original>
